<compile_context>
chip_gen: v6e
topology: v6e:2x2x1
jax: 0.10.0
libtpu: 0.0.40
codegen_flags: <defaults>
</compile_context>

<pallas_src>
import functools

import jax
import jax.numpy as jnp
from jax.experimental import pallas as pl
from jax.experimental.pallas import tpu as pltpu


def listnet_kernel(x_ref, w1_ref, bw_ref, b2_ref, o_ref):
    # Hidden layer on the MXU: (TILE_N, F) @ (F, H), f32 accumulation.
    h = jnp.dot(x_ref[...], w1_ref[...], preferred_element_type=jnp.float32)

    bw = bw_ref[...]                           # (2, H) f32: row 0 = b1, row 1 = w2
    h = jax.nn.sigmoid(h + bw[0:1, :])         # bias broadcast + EUP sigmoid, f32

    # Output layer (H -> 1), emitted lane-dense: contract H of both operands so
    # the batch dimension lands on the lane axis -> (1, TILE_N).  This is the
    # standard q@k.T-style NT matmul; Mosaic folds the rhs transpose into the
    # MXU feed rather than materializing an XLU transpose.
    s = jax.lax.dot_general(bw[1:2, :], h, (((1,), (1,)), ((), ())),
                            preferred_element_type=jnp.float32)
    o_ref[...] = (s + b2_ref[0]).astype(o_ref.dtype)   # scalar bias from SMEM


def _choose_tile(n: int, tile_n: int) -> int:
    """Pick the per-step row tile (all static under jit)."""
    if n > tile_n:
        # Multi-step case: tile_n is a multiple of 128; the last block may be
        # ragged (Pallas masks the partial input DMA, garbage rows are sliced
        # off in the wrapper).
        return tile_n
    if n >= 2048:
        # Would be a single step; split in two so the "parallel" batch axis can
        # shard across v7x's two TensorCores.
        half = -(-n // 2)
        return -(-half // 128) * 128
    # Tiny batch: one block exactly equal to the array dims (always legal).
    return n


@functools.partial(jax.jit, static_argnames=("tile_n",))
def listnet_forward(x, w1, b1, w2, b2, *, tile_n=8192):
    """x: (N, F); w1: (F, H); b1: (1, H); w2: (1, H); b2: (1,) -> (N, 1).

    Computes in x's arriving dtype (pass bf16 x for the bf16 MXU path); no
    wrapper-side pad or cast of x is performed.
    """
    n, f_dim = x.shape
    h_dim = w1.shape[1]
    out_dtype = x.dtype

    # Weights are tiny; match W1 to x's dtype so the MXU takes its fast path.
    w1 = w1.astype(x.dtype)
    # Merge b1 and w2 into one resident (2, H) f32 block; b2 is an SMEM scalar.
    bw = jnp.concatenate([b1.reshape(1, h_dim), w2.reshape(1, h_dim)],
                         axis=0).astype(jnp.float32)
    b2_smem = b2.reshape((1,)).astype(jnp.float32)

    tile_n = max(128, -(-int(tile_n) // 128) * 128)   # lane-align the row tile
    tile_eff = _choose_tile(n, tile_n)
    num_tiles = pl.cdiv(n, tile_eff)

    out = pl.pallas_call(
        listnet_kernel,
        out_shape=jax.ShapeDtypeStruct((num_tiles, tile_eff), out_dtype),
        grid=(num_tiles,),
        in_specs=[
            pl.BlockSpec((tile_eff, f_dim), lambda i: (i, 0)),   # x tile (pipelined)
            pl.BlockSpec((f_dim, h_dim), lambda i: (0, 0)),      # W1, VMEM-resident
            pl.BlockSpec((2, h_dim), lambda i: (0, 0)),          # [b1; w2], resident
            pl.BlockSpec(memory_space=pltpu.MemorySpace.SMEM),   # b2 scalar
        ],
        # Lane-dense output: one (1, tile_eff) row per grid step.
        out_specs=pl.BlockSpec((1, tile_eff), lambda i: (i, 0)),
        compiler_params=pltpu.CompilerParams(
            dimension_semantics=("parallel",)),
    )(x, w1, bw, b2_smem)

    # Layout plumbing only: flatten the slab and drop the ragged-tail rows.
    return out.reshape(-1)[:n].reshape(n, 1)


def init_listnet_params(key, num_input_features, hidden_dim, dtype=jnp.float32):
    """Deterministic init mirroring torch.nn.Linear default (uniform +/- 1/sqrt(fan_in))."""
    k1, k2, k3, k4 = jax.random.split(key, 4)
    bound1 = 1.0 / (num_input_features ** 0.5)
    bound2 = 1.0 / (hidden_dim ** 0.5)
    # W1 stored (in, out) so the kernel computes x @ W1 directly.
    w1 = jax.random.uniform(k1, (num_input_features, hidden_dim), dtype,
                            minval=-bound1, maxval=bound1)
    b1 = jax.random.uniform(k2, (1, hidden_dim), dtype,
                            minval=-bound1, maxval=bound1)
    # w2 stored (1, H) -- same layout as PyTorch Linear(hidden_dim, 1).weight.
    w2 = jax.random.uniform(k3, (1, hidden_dim), dtype,
                            minval=-bound2, maxval=bound2)
    b2 = jax.random.uniform(k4, (1,), dtype,
                            minval=-bound2, maxval=bound2)
    return w1, b1, w2, b2


def _reference(x, w1, b1, w2, b2):
    return jax.nn.sigmoid(x @ w1 + b1) @ w2.T + b2


if __name__ == "__main__":
    num_input_features = 32   # F
    hidden_dim = 32           # H

    key = jax.random.PRNGKey(0)
    kx_small, kx_big, kp = jax.random.split(key, 3)

    w1, b1, w2, b2 = init_listnet_params(kp, num_input_features, hidden_dim)

    # 1) Single small list (8 documents): one grid step, block = full batch.
    x_small = jax.random.normal(kx_small, (8, num_input_features), jnp.float32)
    out_small = jax.block_until_ready(listnet_forward(x_small, w1, b1, w2, b2))
    ref_small = _reference(x_small, w1, b1, w2, b2)
    assert out_small.shape == (8, 1)
    assert jnp.allclose(out_small, ref_small, atol=1e-5, rtol=1e-5)

    # 2) Many lists batched into one call, default tiling (single step).
    x_big = jax.random.normal(kx_big, (600, num_input_features), jnp.float32)
    out_big = jax.block_until_ready(listnet_forward(x_big, w1, b1, w2, b2))
    ref_big = _reference(x_big, w1, b1, w2, b2)
    assert out_big.shape == (600, 1)
    assert jnp.allclose(out_big, ref_big, atol=1e-5, rtol=1e-5)

    # 3) Same batch forced through a multi-step grid with a ragged tail
    #    (tile 256 -> 3 steps, last step partial; exercises no-pad path).
    out_tiled = jax.block_until_ready(
        listnet_forward(x_big, w1, b1, w2, b2, tile_n=256))
    assert out_tiled.shape == (600, 1)
    assert jnp.allclose(out_tiled, ref_big, atol=1e-5, rtol=1e-5)

    # 4) bf16 input produced upstream (no wrapper-side cast of x): bf16 MXU
    #    path with f32 accumulation / sigmoid inside the kernel.
    x_bf16 = x_big.astype(jnp.bfloat16)
    out_bf16 = jax.block_until_ready(listnet_forward(x_bf16, w1, b1, w2, b2))
    assert jnp.allclose(out_bf16.astype(jnp.float32), ref_big,
                        atol=2e-2, rtol=2e-2)

    print("KERNEL_OK")
</pallas_src>

<mosaic_0001>
module attributes {stable_mosaic.version = 11 : i64} {
  func.func @listnet_kernel(%arg0: i32, %arg1: memref<8x32xf32, #tpu.memory_space<vmem>>, %arg2: memref<32x32xf32, #tpu.memory_space<vmem>>, %arg3: memref<2x32xf32, #tpu.memory_space<vmem>>, %arg4: memref<1xf32, #tpu.memory_space<smem>>, %arg5: memref<1x8xf32, #tpu.memory_space<vmem>>) attributes {dimension_semantics = [#tpu.dimension_semantics<parallel>], iteration_bounds = array<i64: 1>, scalar_prefetch = 0 : i64, scratch_operands = 0 : i64, tpu.core_type = #tpu.core_type<tc>, window_params = [{transform_indices = @transform_0, window_bounds = array<i64: 8, 32>}, {pipeline_mode = #tpu.pipeline_mode<synchronous>, transform_indices = @transform_1, window_bounds = array<i64: 32, 32>}, {pipeline_mode = #tpu.pipeline_mode<synchronous>, transform_indices = @transform_2, window_bounds = array<i64: 2, 32>}, {transform_indices = @transform_3, window_bounds = array<i64: 1>}, {transform_indices = @transform_4, window_bounds = array<i64: 1, 8>}]} {
    %c0 = arith.constant 0 : index
    %c0_0 = arith.constant 0 : index
    %0 = vector.load %arg1[%c0, %c0_0] : memref<8x32xf32, #tpu.memory_space<vmem>>, vector<8x32xf32>
    %c0_1 = arith.constant 0 : index
    %c0_2 = arith.constant 0 : index
    %1 = vector.load %arg2[%c0_1, %c0_2] : memref<32x32xf32, #tpu.memory_space<vmem>>, vector<32x32xf32>
    %cst = arith.constant dense<0.000000e+00> : vector<8x32xf32>
    %2 = tpu.matmul %0, %1, %cst {dimension_numbers = #tpu.dot_dimension_numbers<[1], [0], [0], [1], [0, 0, 1, 1], [], []>} : vector<8x32xf32>, vector<32x32xf32>, vector<8x32xf32> -> vector<8x32xf32>
    %c0_3 = arith.constant 0 : index
    %c0_4 = arith.constant 0 : index
    %3 = vector.load %arg3[%c0_3, %c0_4] : memref<2x32xf32, #tpu.memory_space<vmem>>, vector<2x32xf32>
    %4 = vector.extract_strided_slice %3 {offsets = [0, 0], sizes = [1, 32], strides = [1, 1]} : vector<2x32xf32> to vector<1x32xf32>
    %5 = vector.broadcast %4 : vector<1x32xf32> to vector<8x32xf32>
    %6 = arith.addf %2, %5 : vector<8x32xf32>
    %7 = arith.negf %6 : vector<8x32xf32>
    %8 = math.exp %7 : vector<8x32xf32>
    %cst_5 = arith.constant 1.000000e+00 : f32
    %9 = vector.broadcast %cst_5 : f32 to vector<8x32xf32>
    %10 = arith.addf %9, %8 : vector<8x32xf32>
    %11 = arith.divf %9, %10 : vector<8x32xf32>
    %12 = vector.extract_strided_slice %3 {offsets = [1, 0], sizes = [1, 32], strides = [1, 1]} : vector<2x32xf32> to vector<1x32xf32>
    %cst_6 = arith.constant dense<0.000000e+00> : vector<1x8xf32>
    %13 = tpu.matmul %12, %11, %cst_6 {dimension_numbers = #tpu.dot_dimension_numbers<[1], [1], [0], [0], [0, 0, 1, 0], [], []>} : vector<1x32xf32>, vector<8x32xf32>, vector<1x8xf32> -> vector<1x8xf32>
    %c0_7 = arith.constant 0 : index
    %14 = memref.load %arg4[%c0_7] : memref<1xf32, #tpu.memory_space<smem>>
    %15 = vector.broadcast %14 : f32 to vector<1x8xf32>
    %16 = arith.addf %13, %15 : vector<1x8xf32>
    %c0_8 = arith.constant 0 : index
    %c0_9 = arith.constant 0 : index
    %17 = vector.load %arg5[%c0_8, %c0_9] : memref<1x8xf32, #tpu.memory_space<vmem>>, vector<1x8xf32>
    tpu.vector_store %arg5[%c0_8, %c0_9], %16 {strides = array<i32>} : memref<1x8xf32, #tpu.memory_space<vmem>>, vector<1x8xf32>,
    return
  }
  func.func @transform_0(%arg0: i32) -> (i32, i32) {
    %c0_i32 = arith.constant 0 : i32
    %c0_i32_0 = arith.constant 0 : i32
    return %arg0, %c0_i32 : i32, i32
  }
  func.func @transform_1(%arg0: i32) -> (i32, i32) {
    %c0_i32 = arith.constant 0 : i32
    %c0_i32_0 = arith.constant 0 : i32
    %c0_i32_1 = arith.constant 0 : i32
    return %c0_i32, %c0_i32_0 : i32, i32
  }
  func.func @transform_2(%arg0: i32) -> (i32, i32) {
    %c0_i32 = arith.constant 0 : i32
    %c0_i32_0 = arith.constant 0 : i32
    %c0_i32_1 = arith.constant 0 : i32
    return %c0_i32, %c0_i32_0 : i32, i32
  }
  func.func @transform_3(%arg0: i32) -> i32 {
    %c0_i32 = arith.constant 0 : i32
    %c0_i32_0 = arith.constant 0 : i32
    return %c0_i32 : i32
  }
  func.func @transform_4(%arg0: i32) -> (i32, i32) {
    %c0_i32 = arith.constant 0 : i32
    %c0_i32_0 = arith.constant 0 : i32
    return %arg0, %c0_i32 : i32, i32
  }
}

</mosaic_0001>

<llo_original>
// kernel: listnet_forward.1
$region0: #{listnet_forward.1}
  #allocation0 [shape = 'u32[]', space=smem, size = 0x4, offset = 0x4, fixed_abs, tag = 'smem constant byte address 0x4 - core index']
  #allocation1 [shape = 'u32[144,128]{1,0:T(1,128)}', space=vmem, size = 0x12000, scoped, tag = 'internal scratch']
  #allocation2 [shape = 'f32[1]{0:T(128)S(6)}', space=smem, size = 0x200, scoped, tag = 'scoped memory for listnet_forward.1']
  %s0 = inlined_call_operand.hbm [shape: f32[8,32], index: 0, kind: input, shape index: {}]
  %s1 = inlined_call_operand.hbm [shape: f32[32,32], index: 1, kind: input, shape index: {}]
  %s2 = inlined_call_operand.vmem [shape: f32[2,32], index: 2, kind: input, shape index: {}]
  %s3 = inlined_call_operand.<no memory space> [shape: f32[1], index: 3, kind: input, shape index: {}]
  %s4 = inlined_call_operand.hbm [shape: f32[1,8], index: 4, kind: output, shape index: {}]
  %s5 = sld [smem:[#allocation0]]
  $region34: #{listnet_forward.1} parent=0
    _
  %s7 = ssub.s32 1, %s5
  %s8 = scalar_select 0, %s7, %s5
  %9 = sst [smem:[#allocation2]] %s3
  $region1: #{listnet_forward.1} parent=0
    #allocation3 [shape = 'u8[4096]{0}', space=vmem, size = 0x1000, scoped, tag = 'input window, operand 0, single buffered']
    #allocation4 [shape = 's32[1]{0}', space=sflag, size = 0x4, scoped, tag = 'scoped memory for listnet_forward.1']
    #allocation5 [shape = 's32[1]{0}', space=sflag, size = 0x4, scoped, tag = 'scoped memory for listnet_forward.1']
    #allocation6 [shape = 'u8[16384]{0}', space=vmem, size = 0x4000, scoped, tag = 'input window, operand 1, single buffered']
    #allocation7 [shape = 's32[1]{0}', space=sflag, size = 0x4, scoped, tag = 'scoped memory for listnet_forward.1']
    #allocation8 [shape = 'u8[512]{0}', space=vmem, size = 0x400, scoped, tag = 'output window, operand 0, single buffered']
    %10 = vsyncpa [#allocation4], 0
    %11 = vsyncpa [#allocation7], 0
    %12 = vsyncpa [#allocation5], 0
    // Predicated region
    $region2: #{listnet_forward.1} parent=1 // pred_check
      _
    $region3: #{listnet_forward.1} parent=1 // pred_check_branch
      %14 = sbr.rel (0) target = $region5
    $region4: #{listnet_forward.1} parent=1 // pred_region
      %s16 = ssub.s32 128, 128
      %17 = vsyncadd [#allocation4], %s16
      %s19 = sshll.u32 [#allocation3], 4
      %s20 = int_to_ptr.vmem [resolvable:$true] %s19
      %22 = dma.hbm_to_vmem [thread:$0]  %s0, 128, %s20, [#allocation4]
    $region5: #{listnet_forward.1} parent=1 // pred_fallthru
      _
    // Predicated region
    $region6: #{listnet_forward.1} parent=1 // pred_check
      _
    $region7: #{listnet_forward.1} parent=1 // pred_check_branch
      %24 = sbr.rel (0) target = $region9
    $region8: #{listnet_forward.1} parent=1 // pred_region
      %s26 = ssub.s32 512, 512
      %27 = vsyncadd [#allocation7], %s26
      %s28 = sshll.u32 [#allocation6], 4
      %s29 = int_to_ptr.vmem [resolvable:$true] %s28
      %34 = dma.hbm_to_vmem [thread:$0]  %s1, 512, %s29, [#allocation7], 128, 128, 8
    $region9: #{listnet_forward.1} parent=1 // pred_fallthru
      _
    // Predicated region
    $region10: #{listnet_forward.1} parent=1 // pred_check
      _
    $region11: #{listnet_forward.1} parent=1 // pred_check_branch
      %36 = sbr.rel (0) target = $region13
    $region12: #{listnet_forward.1} parent=1 // pred_region
      _
    $region13: #{listnet_forward.1} parent=1 // pred_fallthru
      _
    // Predicated region
    $region14: #{listnet_forward.1} parent=1 // pred_check
      _
    $region15: #{listnet_forward.1} parent=1 // pred_check_branch
      %38 = sbr.rel (0) target = $region17
    $region16: #{listnet_forward.1} parent=1 // pred_region
      _
    $region17: #{listnet_forward.1} parent=1 // pred_fallthru
      _
    // Predicated region
    $region18: #{listnet_forward.1} parent=1 // pred_check
      _
    $region19: #{listnet_forward.1} parent=1 // pred_check_branch
      %40 = sbr.rel (0) target = $region21
    $region20: #{listnet_forward.1} parent=1 // pred_region
      %41 = dma.done [#allocation4], 128
    $region21: #{listnet_forward.1} parent=1 // pred_fallthru
      _
    // Predicated region
    $region22: #{listnet_forward.1} parent=1 // pred_check
      _
    $region23: #{listnet_forward.1} parent=1 // pred_check_branch
      %43 = sbr.rel (0) target = $region25
    $region24: #{listnet_forward.1} parent=1 // pred_region
      %44 = dma.done [#allocation7], 512
    $region25: #{listnet_forward.1} parent=1 // pred_fallthru
      _
    %v45 = vld [vmem:[#allocation3] sm:$0xff]
    %v46 = vld [vmem:[#allocation6] sm:$0xff]
    %v47 = vld [vmem:[#allocation6 + $0x8] sm:$0xff]
    %v48 = vld [vmem:[#allocation6 + $0x10] sm:$0xff]
    %v49 = vld [vmem:[#allocation6 + $0x18] sm:$0xff]
    %v50 = vld [vmem:[%s2] sm:$0x3]
    %v51 = vlaneseq
    %v52 = vshrl.u32 %v51, 7
    %v53 = vsub.s32 0, %v52
    %v54 = vrot.slane %v50, %v53
    %vm55 = vcmask 261120
    %v57 = vsel %vm55, %v45, 0
    %59 = vmatprep.subr.mxu0 0.0
    %60 = vmatpush1.msra.mxu0 0.0
    %61 = vmatprep.subr.mxu0 0.0
    %62 = vmatpush1.msra.mxu0 0.0
    %63 = vmatprep.subr.mxu0 0.0
    %64 = vmatpush1.msra.mxu0 0.0
    %65 = vmatprep.subr.mxu0 0.0
    %66 = vmatpush1.msra.mxu0 0.0
    %67 = vmatprep.subr.mxu0 0.0
    %68 = vmatpush1.msra.mxu0 0.0
    %69 = vmatprep.subr.mxu0 0.0
    %70 = vmatpush1.msra.mxu0 0.0
    %71 = vmatprep.subr.mxu0 0.0
    %72 = vmatpush1.msra.mxu0 0.0
    %73 = vmatprep.subr.mxu0 0.0
    %74 = vmatpush1.msra.mxu0 0.0
    %75 = vmatprep.subr.mxu0 0.0
    %76 = vmatpush1.msra.mxu0 0.0
    %77 = vmatprep.subr.mxu0 0.0
    %78 = vmatpush1.msra.mxu0 0.0
    %79 = vmatprep.subr.mxu0 0.0
    %80 = vmatpush1.msra.mxu0 0.0
    %81 = vmatprep.subr.mxu0 0.0
    %82 = vmatpush1.msra.mxu0 0.0
    %83 = vmatprep.subr.mxu0 0.0
    %84 = vmatpush1.msra.mxu0 %v49
    %85 = vmatprep.subr.mxu0 0.0
    %86 = vmatpush1.msra.mxu0 %v48
    %87 = vmatprep.subr.mxu0 0.0
    %88 = vmatpush1.msra.mxu0 %v47
    %89 = vmatprep.subr.mxu0 0.0
    %90 = vmatpush1.msra.mxu0 %v46
    %91 = vmatprep.subr.mxu0 0.0
    %92 = vmatpush2.msra.mxu0 0.0
    %93 = vmatprep.subr.mxu0 0.0
    %94 = vmatpush2.msra.mxu0 0.0
    %95 = vmatprep.subr.mxu0 0.0
    %96 = vmatpush2.msra.mxu0 0.0
    %97 = vmatprep.subr.mxu0 0.0
    %98 = vmatpush2.msra.mxu0 0.0
    %99 = vmatprep.subr.mxu0 0.0
    %100 = vmatpush2.msra.mxu0 0.0
    %101 = vmatprep.subr.mxu0 0.0
    %102 = vmatpush2.msra.mxu0 0.0
    %103 = vmatprep.subr.mxu0 0.0
    %104 = vmatpush2.msra.mxu0 0.0
    %105 = vmatprep.subr.mxu0 0.0
    %106 = vmatpush2.msra.mxu0 0.0
    %107 = vmatprep.subr.mxu0 0.0
    %108 = vmatpush2.msra.mxu0 0.0
    %109 = vmatprep.subr.mxu0 0.0
    %110 = vmatpush2.msra.mxu0 0.0
    %111 = vmatprep.subr.mxu0 0.0
    %112 = vmatpush2.msra.mxu0 0.0
    %113 = vmatprep.subr.mxu0 0.0
    %114 = vmatpush2.msra.mxu0 0.0
    %115 = vmatprep.subr.mxu0 0.0
    %116 = vmatpush2.msra.mxu0 0.0
    %117 = vmatprep.subr.mxu0 0.0
    %118 = vmatpush2.msra.mxu0 0.0
    %119 = vmatprep.subr.mxu0 0.0
    %120 = vmatpush2.msra.mxu0 0.0
    %121 = vmatprep.subr.mxu0 0.0
    %122 = vmatpush2.msra.mxu0 0.0
    %123 = vmatprep.mubr.f32.mxu0 0.0
    %124 = vmatmul.mubr.f32.gmra.mxu0 %v57
    %v125 = vpop.f32.mrf.mxu0
    %v126 = vadd.f32 %v54, %v125
    %v127 = vpop.f32.mrf.mxu0
    %128 = vdwg.mxu0
    %v129 = vxor.u32 %v126, 2147483648
    %v130 = vmul.f32 %v129, 1.442695
    %v131 = vpow.pop %v130
    %v132 = vadd.f32 %v131, 1.0
    %v133 = vrcp.pop %v132
    %v134 = vmul.f32 1.0, %v133
    %s135 = sld [smem:[#allocation2]]
    %v136 = vstv %s135
    %v138 = vrot.slane %v50, 1
    %v139 = vsel %vm55, %v138, 0
    %v142 = vsel %vm55, %v134, 0
    %144 = vmatprep.subr.mxu0 0.0
    %145 = vmatpush1.xpose.msra.mxu0 0.0
    %146 = vmatprep.subr.mxu0 0.0
    %147 = vmatpush1.xpose.msra.mxu0 0.0
    %148 = vmatprep.subr.mxu0 0.0
    %149 = vmatpush1.xpose.msra.mxu0 0.0
    %150 = vmatprep.subr.mxu0 0.0
    %151 = vmatpush1.xpose.msra.mxu0 0.0
    %152 = vmatprep.subr.mxu0 0.0
    %153 = vmatpush1.xpose.msra.mxu0 0.0
    %154 = vmatprep.subr.mxu0 0.0
    %155 = vmatpush1.xpose.msra.mxu0 0.0
    %156 = vmatprep.subr.mxu0 0.0
    %157 = vmatpush1.xpose.msra.mxu0 0.0
    %158 = vmatprep.subr.mxu0 0.0
    %159 = vmatpush1.xpose.msra.mxu0 0.0
    %160 = vmatprep.subr.mxu0 0.0
    %161 = vmatpush1.xpose.msra.mxu0 0.0
    %162 = vmatprep.subr.mxu0 0.0
    %163 = vmatpush1.xpose.msra.mxu0 0.0
    %164 = vmatprep.subr.mxu0 0.0
    %165 = vmatpush1.xpose.msra.mxu0 0.0
    %166 = vmatprep.subr.mxu0 0.0
    %167 = vmatpush1.xpose.msra.mxu0 0.0
    %168 = vmatprep.subr.mxu0 0.0
    %169 = vmatpush1.xpose.msra.mxu0 0.0
    %170 = vmatprep.subr.mxu0 0.0
    %171 = vmatpush1.xpose.msra.mxu0 0.0
    %172 = vmatprep.subr.mxu0 0.0
    %173 = vmatpush1.xpose.msra.mxu0 0.0
    %174 = vmatprep.subr.mxu0 0.0
    %175 = vmatpush1.xpose.msra.mxu0 %v142
    %176 = vmatprep.subr.mxu0 0.0
    %177 = vmatpush2.xpose.msra.mxu0 0.0
    %178 = vmatprep.subr.mxu0 0.0
    %179 = vmatpush2.xpose.msra.mxu0 0.0
    %180 = vmatprep.subr.mxu0 0.0
    %181 = vmatpush2.xpose.msra.mxu0 0.0
    %182 = vmatprep.subr.mxu0 0.0
    %183 = vmatpush2.xpose.msra.mxu0 0.0
    %184 = vmatprep.subr.mxu0 0.0
    %185 = vmatpush2.xpose.msra.mxu0 0.0
    %186 = vmatprep.subr.mxu0 0.0
    %187 = vmatpush2.xpose.msra.mxu0 0.0
    %188 = vmatprep.subr.mxu0 0.0
    %189 = vmatpush2.xpose.msra.mxu0 0.0
    %190 = vmatprep.subr.mxu0 0.0
    %191 = vmatpush2.xpose.msra.mxu0 0.0
    %192 = vmatprep.subr.mxu0 0.0
    %193 = vmatpush2.xpose.msra.mxu0 0.0
    %194 = vmatprep.subr.mxu0 0.0
    %195 = vmatpush2.xpose.msra.mxu0 0.0
    %196 = vmatprep.subr.mxu0 0.0
    %197 = vmatpush2.xpose.msra.mxu0 0.0
    %198 = vmatprep.subr.mxu0 0.0
    %199 = vmatpush2.xpose.msra.mxu0 0.0
    %200 = vmatprep.subr.mxu0 0.0
    %201 = vmatpush2.xpose.msra.mxu0 0.0
    %202 = vmatprep.subr.mxu0 0.0
    %203 = vmatpush2.xpose.msra.mxu0 0.0
    %204 = vmatprep.subr.mxu0 0.0
    %205 = vmatpush2.xpose.msra.mxu0 0.0
    %206 = vmatprep.subr.mxu0 0.0
    %207 = vmatpush2.xpose.msra.mxu0 0.0
    %208 = vmatprep.mubr.f32.mxu0 0.0
    %209 = vmatmul.mubr.f32.gmra.mxu0 %v139
    %v210 = vpop.f32.mrf.mxu0
    %v211 = vadd.f32 %v136, %v210
    %v212 = vpop.f32.mrf.mxu0
    %213 = vdwg.mxu0
    %vm214 = vcmask 57344
    %215 = vst.msk [vmem:[#allocation8] sm:$0x1] %vm214, %v211
    // Predicated region
    $region26: #{listnet_forward.1} parent=1 // pred_check
      _
    $region27: #{listnet_forward.1} parent=1 // pred_check_branch
      %217 = sbr.rel (0) target = $region29
    $region28: #{listnet_forward.1} parent=1 // pred_region
      %s219 = ssub.s32 16, 16
      %220 = vsyncadd [#allocation5], %s219
      %s222 = sshll.u32 [#allocation8], 4
      %s223 = int_to_ptr.vmem [resolvable:$true] %s222
      %225 = dma.vmem_to_hbm [thread:$0]  %s223, 16, %s4, [#allocation5]
    $region29: #{listnet_forward.1} parent=1 // pred_fallthru
      _
    // Predicated region
    $region30: #{listnet_forward.1} parent=1 // pred_check
      _
    $region31: #{listnet_forward.1} parent=1 // pred_check_branch
      %227 = sbr.rel (0) target = $region33
    $region32: #{listnet_forward.1} parent=1 // pred_region
      %228 = dma.done [#allocation5], 16
    $region33: #{listnet_forward.1} parent=1 // pred_fallthru
      _
    %229 = vsyncpa [#allocation4], 1
    %230 = vsyncpa [#allocation7], 1
    %231 = vsyncpa [#allocation5], 1

</llo_original>
